<compile_context>
chip_gen: v7x
topology: tpu7x:2x2x1
jax: 0.10.0
libtpu: 0.0.40
codegen_flags: <defaults>
</compile_context>

<pallas_src>
import math

import numpy as np
import jax
import jax.numpy as jnp
from jax.experimental import pallas as pl
from jax.experimental.pallas import tpu as pltpu

LN_EPS = 1e-5


def _merge_kernel(x_ref, p_ref, w_ref, o_ref):
    """Fused 2x2 patch-merge + LayerNorm(4C) + Linear(4C -> 2C, no bias).

    x_ref: (TB, 2, W2, 2C)  input slab; [:,0,w2,:] = [x0|x2], [:,1,w2,:] = [x1|x3]
    p_ref: (2, 4C) f32      rows = [gamma_perm, beta_perm]
    w_ref: (4C, 2C)         permuted reduction weight (matmul/storage dtype)
    o_ref: (TB*W2, 2C)      one row per merged output pixel
    """
    tb, _, w2, k2 = x_ref.shape
    rows = tb * w2

    # NOTE: the (TB, W2, K2) -> (TB*W2, K2) collapse is a free reinterpretation
    # only when W2 % 8 == 0; otherwise Mosaic inserts a relayout copy.
    # TODO(synk): for W2 = 28 / 14 (late VMamba stages) keep the math 3-D or
    # pad W so W2 is a multiple of 8.
    xa = x_ref[:, 0, :, :].reshape(rows, k2)
    xb = x_ref[:, 1, :, :].reshape(rows, k2)
    x4 = jnp.concatenate([xa, xb], axis=-1).astype(jnp.float32)   # (rows, 4C)

    # Two-pass LayerNorm statistics in f32 (matches PyTorch LN, biased var).
    inv_n = 1.0 / (2 * k2)
    mean = jnp.sum(x4, axis=-1, keepdims=True) * inv_n
    xc = x4 - mean
    var = jnp.sum(xc * xc, axis=-1, keepdims=True) * inv_n
    inv = jax.lax.rsqrt(var + LN_EPS)

    p = p_ref[...].astype(jnp.float32)
    gamma = p[0:1, :]
    beta = p[1:2, :]

    w = w_ref[...]                               # keep storage dtype (bf16-friendly)
    y = (xc * inv * gamma + beta).astype(w.dtype)

    # Single K=4C matmul, f32 accumulation on the MXU.
    acc = jnp.dot(y, w, preferred_element_type=jnp.float32)
    o_ref[...] = acc.astype(o_ref.dtype)


def _vmem_profile():
    """Returns (tile budget bytes, vmem_limit cap bytes) per TPU generation."""
    try:
        kind = jax.devices()[0].device_kind.lower()
    except Exception:
        kind = ""
    if "v7" in kind:                      # 64 MiB physical VMEM, 2 TensorCores
        return 36 << 20, 56 << 20
    if "v5" in kind or "v6" in kind:      # 128 MiB physical VMEM, HBM-bound here
        return 56 << 20, 100 << 20
    return 24 << 20, 64 << 20             # unknown generation: conservative


def patch_merging_2d(
    x,
    gamma,
    beta,
    w_reduction,
    *,
    target_pixel_rows: int = 1024,   # sweep 512..1024
    vmem_budget_bytes: int = None,   # default: generation-aware
    out_dtype=None,                  # e.g. jnp.bfloat16 when the consumer is bf16
    matmul_dtype=None,               # defaults to the weight's dtype (pass bf16 weights)
    input_buffer_count: int = 2,     # sweep 3 on v7x if DMA-exposed
    min_grid_steps: int = 4,         # >= 2 per v7x TensorCore + overlap
):
    """
    x:           (B, H, W, C)
    gamma, beta: (4*C,)        LayerNorm affine params
    w_reduction: (2*C, 4*C)    nn.Linear weight (PyTorch layout, bias=False)
    returns:     (B, H//2, W//2, 2*C)
    """
    B, H, W, C = x.shape
    # PyTorch SHAPE_FIX branch: crop odd H/W down to even.
    if H % 2 != 0 or W % 2 != 0:
        x = x[:, : 2 * (H // 2), : 2 * (W // 2), :]
        H, W = 2 * (H // 2), 2 * (W // 2)
    H2, W2 = H // 2, W // 2
    K2 = 2 * C
    C4, C2 = 4 * C, 2 * C

    out_dtype = x.dtype if out_dtype is None else jnp.dtype(out_dtype)
    matmul_dtype = (w_reduction.dtype if matmul_dtype is None
                    else jnp.dtype(matmul_dtype))
    budget, cap = _vmem_profile()
    if vmem_budget_bytes is not None:
        budget = int(vmem_budget_bytes)

    R = B * H2                 # "super-rows": each holds W2 merged pixels
    rows_px = R * W2

    # Free, contiguous reshape — no HBM copy, no gather in XLA.
    x4 = x.reshape(R, 2, W2, K2)

    # Fold the induced channel permutation into the parameters.
    idx = jnp.arange(C)
    perm = jnp.concatenate([idx, idx + 2 * C, idx + C, idx + 3 * C])
    gamma_p = gamma.astype(jnp.float32)[perm]
    beta_p = beta.astype(jnp.float32)[perm]
    params = jnp.stack([gamma_p, beta_p], axis=0)                        # (2, 4C)
    w_t_p = jnp.transpose(w_reduction)[perm, :].astype(matmul_dtype)    # (4C, 2C)

    # ---- tile selection (VMEM-budgeted, counts in-kernel temporaries) ----
    x_it = np.dtype(x.dtype).itemsize
    o_it = np.dtype(out_dtype).itemsize
    m_it = np.dtype(matmul_dtype).itemsize

    in_row = 2 * W2 * K2 * x_it                      # pipeline input, per super-row
    out_row = W2 * C2 * o_it                         # pipeline output, per super-row
    tmp_row = W2 * (C4 * 4 + C4 * m_it + C2 * 4)     # f32 4C tile + y + f32 acc
    const_bytes = 2 * (C4 * C2 * m_it + 2 * C4 * 4)  # weight + params, 2-deep buffered

    def _need(t):
        return (max(2, input_buffer_count) * t * in_row
                + 2 * t * out_row
                + t * tmp_row
                + const_bytes
                + (2 << 20))                          # fixed headroom

    tb = max(1, min(R, target_pixel_rows // max(1, W2)))
    while tb > 1 and _need(tb) > budget:
        tb = max(1, tb // 2)
    # Keep >= min_grid_steps grid steps (v7x: 2 TCs + prefetch/writeback overlap).
    if R >= min_grid_steps and pl.cdiv(R, tb) < min_grid_steps:
        tb = pl.cdiv(R, min_grid_steps)
    # Align the output block rows to the packed sublane of out_dtype.
    pack = {1: 32, 2: 16}.get(o_it, 8)
    req = pack // math.gcd(W2, pack)
    if tb % req != 0:
        down = (tb // req) * req
        tb = down if down > 0 else min(R, req)
    tb = max(1, min(tb, R))

    grid_n = pl.cdiv(R, tb)
    vmem_limit = int(min(cap, max(_need(tb), 32 << 20)))

    x_spec_kwargs = {}
    if input_buffer_count != 2:
        x_spec_kwargs["pipeline_mode"] = pl.Buffered(input_buffer_count)

    cost = pl.CostEstimate(
        flops=2 * rows_px * C4 * C2 + 10 * rows_px * C4,
        transcendentals=rows_px,
        bytes_accessed=(R * 2 * W2 * K2 * x_it
                        + C4 * C2 * m_it + 2 * C4 * 4
                        + rows_px * C2 * o_it),
    )

    out = pl.pallas_call(
        _merge_kernel,
        out_shape=jax.ShapeDtypeStruct((rows_px, C2), out_dtype),
        grid_spec=pltpu.PrefetchScalarGridSpec(
            num_scalar_prefetch=0,
            grid=(grid_n,),
            in_specs=[
                pl.BlockSpec((tb, 2, W2, K2), lambda i: (i, 0, 0, 0),
                             **x_spec_kwargs),
                pl.BlockSpec((2, C4), lambda i: (0, 0)),
                pl.BlockSpec((C4, C2), lambda i: (0, 0)),
            ],
            out_specs=pl.BlockSpec((tb * W2, C2), lambda i: (i, 0)),
        ),
        compiler_params=pltpu.CompilerParams(
            dimension_semantics=("parallel",),
            vmem_limit_bytes=vmem_limit,
        ),
        cost_estimate=cost,
    )(x4, params, w_t_p)

    return out.reshape(B, H2, W2, C2)


def _reference(x, gamma, beta, w_reduction):
    """Pure-JAX reference mirroring the PyTorch forward (canonical ordering)."""
    H, W = x.shape[1], x.shape[2]
    x = x[:, : 2 * (H // 2), : 2 * (W // 2), :]
    x0 = x[:, 0::2, 0::2, :]
    x1 = x[:, 1::2, 0::2, :]
    x2 = x[:, 0::2, 1::2, :]
    x3 = x[:, 1::2, 1::2, :]
    xm = jnp.concatenate([x0, x1, x2, x3], axis=-1)
    mean = jnp.mean(xm, axis=-1, keepdims=True)
    var = jnp.mean((xm - mean) ** 2, axis=-1, keepdims=True)
    xn = (xm - mean) / jnp.sqrt(var + LN_EPS) * gamma + beta
    return jnp.einsum("bhwk,ok->bhwo", xn, w_reduction)


if __name__ == "__main__":
    key = jax.random.PRNGKey(0)
    B, H, W, dim = 2, 16, 16, 32          # 4*dim = 128 lanes, 2*dim = 64 out

    kx, kw, kg, kb = jax.random.split(key, 4)
    x = jax.random.normal(kx, (B, H, W, dim), dtype=jnp.float32)

    # Parameter shapes from PatchMerging2D.__init__:
    #   reduction: nn.Linear(4*dim, 2*dim, bias=False) -> weight (2*dim, 4*dim)
    #   norm:      nn.LayerNorm(4*dim)                 -> gamma, beta (4*dim,)
    bound = 1.0 / jnp.sqrt(4.0 * dim)
    w_reduction = jax.random.uniform(
        kw, (2 * dim, 4 * dim), minval=-bound, maxval=bound, dtype=jnp.float32)
    # Non-trivial affine params so the parameter-permutation path is exercised.
    gamma = jax.random.uniform(kg, (4 * dim,), minval=0.5, maxval=1.5,
                               dtype=jnp.float32)
    beta = 0.1 * jax.random.normal(kb, (4 * dim,), dtype=jnp.float32)

    out = patch_merging_2d(x, gamma, beta, w_reduction)
    out = jax.block_until_ready(out)

    ref = _reference(x, gamma, beta, w_reduction)
    assert out.shape == (B, H // 2, W // 2, 2 * dim), out.shape
    err = float(jnp.max(jnp.abs(out.astype(jnp.float32) - ref)))
    assert jnp.allclose(out.astype(jnp.float32), ref, atol=1e-3, rtol=1e-3), err
    print("KERNEL_OK")
</pallas_src>

<mosaic_0001>
module attributes {stable_mosaic.version = 11 : i64} {
  func.func @_merge_kernel(%arg0: i32, %arg1: memref<4x2x8x64xf32, #tpu.memory_space<vmem>>, %arg2: memref<2x128xf32, #tpu.memory_space<vmem>>, %arg3: memref<128x64xf32, #tpu.memory_space<vmem>>, %arg4: memref<32x64xf32, #tpu.memory_space<vmem>>) attributes {dimension_semantics = [#tpu.dimension_semantics<parallel>], iteration_bounds = array<i64: 4>, scalar_prefetch = 0 : i64, scratch_operands = 0 : i64, tpu.core_type = #tpu.core_type<tc>, window_params = [{transform_indices = @transform_0, window_bounds = array<i64: 4, 2, 8, 64>}, {pipeline_mode = #tpu.pipeline_mode<synchronous>, transform_indices = @transform_1, window_bounds = array<i64: 2, 128>}, {pipeline_mode = #tpu.pipeline_mode<synchronous>, transform_indices = @transform_2, window_bounds = array<i64: 128, 64>}, {transform_indices = @transform_3, window_bounds = array<i64: 32, 64>}]} {
    %c0 = arith.constant 0 : index
    %c0_0 = arith.constant 0 : index
    %c0_1 = arith.constant 0 : index
    %c0_2 = arith.constant 0 : index
    %0 = vector.load %arg1[%c0, %c0_0, %c0_1, %c0_2] : memref<4x2x8x64xf32, #tpu.memory_space<vmem>>, vector<4x1x8x64xf32>
    %1 = vector.shape_cast %0 : vector<4x1x8x64xf32> to vector<4x8x64xf32>
    %2 = vector.shape_cast %1 : vector<4x8x64xf32> to vector<32x64xf32>
    %c0_3 = arith.constant 0 : index
    %c1 = arith.constant 1 : index
    %c0_4 = arith.constant 0 : index
    %c0_5 = arith.constant 0 : index
    %3 = vector.load %arg1[%c0_3, %c1, %c0_4, %c0_5] : memref<4x2x8x64xf32, #tpu.memory_space<vmem>>, vector<4x1x8x64xf32>
    %4 = vector.shape_cast %3 : vector<4x1x8x64xf32> to vector<4x8x64xf32>
    %5 = vector.shape_cast %4 : vector<4x8x64xf32> to vector<32x64xf32>
    %6 = tpu.concatenate %2, %5 in 1 : vector<32x64xf32>, vector<32x64xf32> -> vector<32x128xf32>
    %cst = arith.constant dense<0.000000e+00> : vector<32xf32>
    %7 = vector.multi_reduction <add>, %6, %cst [1] : vector<32x128xf32> to vector<32xf32>
    %8 = vector.shape_cast %7 : vector<32xf32> to vector<32x1xf32>
    %cst_6 = arith.constant 7.812500e-03 : f32
    %9 = vector.broadcast %cst_6 : f32 to vector<32x1xf32>
    %10 = arith.mulf %8, %9 : vector<32x1xf32>
    %11 = vector.broadcast %10 : vector<32x1xf32> to vector<32x128xf32>
    %12 = arith.subf %6, %11 : vector<32x128xf32>
    %13 = arith.mulf %12, %12 : vector<32x128xf32>
    %cst_7 = arith.constant dense<0.000000e+00> : vector<32xf32>
    %14 = vector.multi_reduction <add>, %13, %cst_7 [1] : vector<32x128xf32> to vector<32xf32>
    %15 = vector.shape_cast %14 : vector<32xf32> to vector<32x1xf32>
    %cst_8 = arith.constant 7.812500e-03 : f32
    %16 = vector.broadcast %cst_8 : f32 to vector<32x1xf32>
    %17 = arith.mulf %15, %16 : vector<32x1xf32>
    %cst_9 = arith.constant 9.99999974E-6 : f32
    %18 = vector.broadcast %cst_9 : f32 to vector<32x1xf32>
    %19 = arith.addf %17, %18 : vector<32x1xf32>
    %20 = math.rsqrt %19 : vector<32x1xf32>
    %c0_10 = arith.constant 0 : index
    %c0_11 = arith.constant 0 : index
    %21 = vector.load %arg2[%c0_10, %c0_11] : memref<2x128xf32, #tpu.memory_space<vmem>>, vector<2x128xf32>
    %22 = vector.extract_strided_slice %21 {offsets = [0, 0], sizes = [1, 128], strides = [1, 1]} : vector<2x128xf32> to vector<1x128xf32>
    %23 = vector.extract_strided_slice %21 {offsets = [1, 0], sizes = [1, 128], strides = [1, 1]} : vector<2x128xf32> to vector<1x128xf32>
    %c0_12 = arith.constant 0 : index
    %c0_13 = arith.constant 0 : index
    %24 = vector.load %arg3[%c0_12, %c0_13] : memref<128x64xf32, #tpu.memory_space<vmem>>, vector<128x64xf32>
    %25 = vector.broadcast %20 : vector<32x1xf32> to vector<32x128xf32>
    %26 = arith.mulf %12, %25 : vector<32x128xf32>
    %27 = vector.broadcast %22 : vector<1x128xf32> to vector<32x128xf32>
    %28 = arith.mulf %26, %27 : vector<32x128xf32>
    %29 = vector.broadcast %23 : vector<1x128xf32> to vector<32x128xf32>
    %30 = arith.addf %28, %29 : vector<32x128xf32>
    %cst_14 = arith.constant dense<0.000000e+00> : vector<32x64xf32>
    %31 = tpu.matmul %30, %24, %cst_14 {dimension_numbers = #tpu.dot_dimension_numbers<[1], [0], [0], [1], [0, 0, 1, 1], [], []>} : vector<32x128xf32>, vector<128x64xf32>, vector<32x64xf32> -> vector<32x64xf32>
    %c0_15 = arith.constant 0 : index
    %c0_16 = arith.constant 0 : index
    %32 = vector.load %arg4[%c0_15, %c0_16] : memref<32x64xf32, #tpu.memory_space<vmem>>, vector<32x64xf32>
    tpu.vector_store %arg4[%c0_15, %c0_16], %31 {strides = array<i32>} : memref<32x64xf32, #tpu.memory_space<vmem>>, vector<32x64xf32>,
    return
  }
  func.func @transform_0(%arg0: i32) -> (i32, i32, i32, i32) {
    %c0_i32 = arith.constant 0 : i32
    %c0_i32_0 = arith.constant 0 : i32
    %c0_i32_1 = arith.constant 0 : i32
    %c0_i32_2 = arith.constant 0 : i32
    return %arg0, %c0_i32, %c0_i32_0, %c0_i32_1 : i32, i32, i32, i32
  }
  func.func @transform_1(%arg0: i32) -> (i32, i32) {
    %c0_i32 = arith.constant 0 : i32
    %c0_i32_0 = arith.constant 0 : i32
    %c0_i32_1 = arith.constant 0 : i32
    return %c0_i32, %c0_i32_0 : i32, i32
  }
  func.func @transform_2(%arg0: i32) -> (i32, i32) {
    %c0_i32 = arith.constant 0 : i32
    %c0_i32_0 = arith.constant 0 : i32
    %c0_i32_1 = arith.constant 0 : i32
    return %c0_i32, %c0_i32_0 : i32, i32
  }
  func.func @transform_3(%arg0: i32) -> (i32, i32) {
    %c0_i32 = arith.constant 0 : i32
    %c0_i32_0 = arith.constant 0 : i32
    return %arg0, %c0_i32 : i32, i32
  }
}

</mosaic_0001>

<llo_original>
// kernel: tpu_custom_call.1
$region0: #{tpu_custom_call.1}
  #allocation0 [shape = 'u32[]', space=smem, size = 0x4, offset = 0x4, fixed_abs, tag = 'smem constant byte address 0x4 - core index']
  #allocation1 [shape = 'u32[144,128]{1,0:T(1,128)}', space=vmem, size = 0x12000, scoped, tag = 'internal scratch']
  %s0 = inlined_call_operand.hbm [shape: f32[16,2,8,64], index: 0, kind: input, shape index: {}]
  %s1 = inlined_call_operand.vmem [shape: f32[2,128], index: 1, kind: input, shape index: {}]
  %s2 = inlined_call_operand.vmem [shape: f32[128,64], index: 2, kind: input, shape index: {}]
  %s3 = inlined_call_operand.vmem [shape: f32[128,64], index: 3, kind: output, shape index: {}]
  %s4 = sld [smem:[#allocation0]]
  $region49: #{tpu_custom_call.1} parent=0
    _
  %s6 = ssub.s32 1, %s4
  %s7 = scalar_select 0, %s6, %s4
  $region1: #{tpu_custom_call.1} parent=0
    #allocation2 [shape = 'u8[65536]{0}', space=vmem, size = 0x10000, scoped, tag = 'input window, operand 0']
    #allocation3 [shape = 's32[2]{0}', space=sflag, size = 0x8, scoped, tag = 'scoped memory for tpu_custom_call.1']
    %8 = vsyncpa [#allocation3], 0
    %s9 = scalar_lea.sflag [#allocation3], 1
    %10 = vsyncpa %s9, 0
    loop: start=0, step=1, limit=6
    $region2: #{tpu_custom_call.1} parent=1 // loop_pre_header
      _
    $region3: #{tpu_custom_call.1} parent=1 // loop_header
      %s12 = sphi 0, %s16
      %p13 = scmp.ge.s32.totalorder %s12, 6
      %s22 = sphi 0, %s24
      %s25 = sphi 0, %s22
      %s26 = sphi 0, %s25
      %s42 = sphi 0, %s26
      %s46 = sphi 0, %s46
      %s48 = sphi 0, %s46
      %s49 = sphi 0, %s48
      %s63 = sphi 0, %s49
      %s67 = sphi 0, %s67
      %s69 = sphi 0, %s67
      %s70 = sphi 0, %s69
      %s84 = sphi 0, %s70
      %s90 = sphi 0, %s92
      %s93 = sphi 0, %s90
      %s94 = sphi 0, %s93
      %s110 = sphi 0, %s94
    $region4: #{tpu_custom_call.1} parent=1 // loop_header_branch
      %15 = sbr.rel (%p13) target = $region8
    $region5: #{tpu_custom_call.1} parent=1 // loop_body
      %s17 = ssub.s32 %s12, 1
      %s18 = ssub.s32 %s12, 2
      %s19 = sadd.s32 %s12, 1
      %s20 = ssub.s32 %s12, %s19
      %p21 = scmp.eq.s32.totalorder %s20, 0
      %s23 = sadd.s32 %s22, 1
      %s24 = scalar_select %p21, %s22, %s23
      %p27 = pneg %p21
      %p28 = scmp.eq.s32.totalorder %s12, 3
      %p29 = por %p27, %p28
      %p30 = scmp.ne.s32.totalorder %s22, %s25
      %p31 = scmp.eq.s32.totalorder %s12, 0
      %p32 = por %p30, %p31
      %p33 = scmp.ne.s32.totalorder %s22, %s25
      %p34 = scmp.eq.s32.totalorder %s17, 3
      %p35 = por %p33, %p34
      %p36 = scmp.ne.s32.totalorder %s25, %s26
      %p37 = scmp.eq.s32.totalorder %s17, 0
      %p38 = por %p36, %p37
      %p39 = scmp.ne.s32.totalorder %s25, %s26
      %p40 = scmp.eq.s32.totalorder %s18, 3
      %p41 = por %p39, %p40
      %p43 = scmp.ne.s32.totalorder %s26, %s42
      %p44 = scmp.eq.s32.totalorder %s18, 0
      %p45 = por %p43, %p44
      %s47 = sadd.s32 %s46, 1
      %p50 = scmp.eq.s32.totalorder %s12, 3
      %p51 = scmp.ne.s32.totalorder %s46, %s48
      %p52 = scmp.eq.s32.totalorder %s12, 0
      %p53 = por %p51, %p52
      %p54 = scmp.ne.s32.totalorder %s46, %s48
      %p55 = scmp.eq.s32.totalorder %s17, 3
      %p56 = por %p54, %p55
      %p57 = scmp.ne.s32.totalorder %s48, %s49
      %p58 = scmp.eq.s32.totalorder %s17, 0
      %p59 = por %p57, %p58
      %p60 = scmp.ne.s32.totalorder %s48, %s49
      %p61 = scmp.eq.s32.totalorder %s18, 3
      %p62 = por %p60, %p61
      %p64 = scmp.ne.s32.totalorder %s49, %s63
      %p65 = scmp.eq.s32.totalorder %s18, 0
      %p66 = por %p64, %p65
      %s68 = sadd.s32 %s67, 1
      %p71 = scmp.eq.s32.totalorder %s12, 3
      %p72 = scmp.ne.s32.totalorder %s67, %s69
      %p73 = scmp.eq.s32.totalorder %s12, 0
      %p74 = por %p72, %p73
      %p75 = scmp.ne.s32.totalorder %s67, %s69
      %p76 = scmp.eq.s32.totalorder %s17, 3
      %p77 = por %p75, %p76
      %p78 = scmp.ne.s32.totalorder %s69, %s70
      %p79 = scmp.eq.s32.totalorder %s17, 0
      %p80 = por %p78, %p79
      %p81 = scmp.ne.s32.totalorder %s69, %s70
      %p82 = scmp.eq.s32.totalorder %s18, 3
      %p83 = por %p81, %p82
      %p85 = scmp.ne.s32.totalorder %s70, %s84
      %p86 = scmp.eq.s32.totalorder %s18, 0
      %p87 = por %p85, %p86
      %s88 = ssub.s32 %s12, %s19
      %p89 = scmp.eq.s32.totalorder %s88, 0
      %s91 = sadd.s32 %s90, 1
      %s92 = scalar_select %p89, %s90, %s91
      %p95 = pneg %p89
      %p96 = scmp.eq.s32.totalorder %s12, 3
      %p97 = por %p95, %p96
      %p98 = scmp.ne.s32.totalorder %s90, %s93
      %p99 = scmp.eq.s32.totalorder %s12, 0
      %p100 = por %p98, %p99
      %p101 = scmp.ne.s32.totalorder %s90, %s93
      %p102 = scmp.eq.s32.totalorder %s17, 3
      %p103 = por %p101, %p102
      %p104 = scmp.ne.s32.totalorder %s93, %s94
      %p105 = scmp.eq.s32.totalorder %s17, 0
      %p106 = por %p104, %p105
      %p107 = scmp.ne.s32.totalorder %s93, %s94
      %p108 = scmp.eq.s32.totalorder %s18, 3
      %p109 = por %p107, %p108
      %p111 = scmp.ne.s32.totalorder %s94, %s110
      %p112 = scmp.eq.s32.totalorder %s18, 0
      %p113 = por %p111, %p112
      %p114 = scmp.le.s32.totalorder 1, %s12
      %p115 = scmp.lt.s32.totalorder %s12, 5
      %p116 = pnand %p114, %p115
      %p117 = pneg %p116
      // Predicated region
      $region9: #{tpu_custom_call.1} parent=5 // pred_check
        _
      $region10: #{tpu_custom_call.1} parent=5 // pred_check_branch
        %119 = sbr.rel (%p116) target = $region12
      $region11: #{tpu_custom_call.1} parent=5 // pred_region
        %s120 = ssub.s32 %s12, 1
        // Predicated region
        $region13: #{tpu_custom_call.1} parent=11 // pred_check
          %p121 = pneg %p59
        $region14: #{tpu_custom_call.1} parent=11 // pred_check_branch
          %123 = sbr.rel (%p121) target = $region16
        $region15: #{tpu_custom_call.1} parent=11 // pred_region
          _
        $region16: #{tpu_custom_call.1} parent=11 // pred_fallthru
          _
        // Predicated region
        $region17: #{tpu_custom_call.1} parent=11 // pred_check
          %p124 = pneg %p80
        $region18: #{tpu_custom_call.1} parent=11 // pred_check_branch
          %126 = sbr.rel (%p124) target = $region20
        $region19: #{tpu_custom_call.1} parent=11 // pred_region
          _
        $region20: #{tpu_custom_call.1} parent=11 // pred_fallthru
          _
      $region12: #{tpu_custom_call.1} parent=5 // pred_fallthru
        _
      %p127 = scmp.lt.s32.totalorder %s12, 4
      // Predicated region
      $region21: #{tpu_custom_call.1} parent=5 // pred_check
        %p128 = pneg %p127
      $region22: #{tpu_custom_call.1} parent=5 // pred_check_branch
        %130 = sbr.rel (%p128) target = $region24
      $region23: #{tpu_custom_call.1} parent=5 // pred_region
        // Predicated region
        $region25: #{tpu_custom_call.1} parent=23 // pred_check
          %p131 = pneg %p32
        $region26: #{tpu_custom_call.1} parent=23 // pred_check_branch
          %133 = sbr.rel (%p131) target = $region28
        $region27: #{tpu_custom_call.1} parent=23 // pred_region
          %s134 = sand.u32 %s22, 1
          %s135 = scalar_lea.sflag [#allocation3], %s134
          %s136 = sand.u32 %s22, 1
          %s137 = smul.addr %s136, 64
          %s138 = scalar_lea.vmem [#allocation2], %s137
          %s139 = smul.u32 4, %s12
          %s141 = ssub.s32 1024, 1024
          %142 = vsyncadd %s135, %s141
          %s143 = smul.addr %s139, 2
          %s144 = smul.addr %s143, 128
          %s145 = scalar_lea.hbm %s0, %s144
          %s146 = sshll.u32 %s138, 4
          %s147 = int_to_ptr.vmem [resolvable:$true] %s146
          %152 = dma.hbm_to_vmem [thread:$0]  %s145, 1024, %s147, %s135, 128, 128, 8
        $region28: #{tpu_custom_call.1} parent=23 // pred_fallthru
          _
      $region24: #{tpu_custom_call.1} parent=5 // pred_fallthru
        _
      %p153 = scmp.le.s32.totalorder 1, %s12
      %p154 = scmp.lt.s32.totalorder %s12, 5
      %p155 = pnand %p153, %p154
      %p156 = pneg %p155
      // Predicated region
      $region29: #{tpu_custom_call.1} parent=5 // pred_check
        _
      $region30: #{tpu_custom_call.1} parent=5 // pred_check_branch
        %158 = sbr.rel (%p155) target = $region32
      $region31: #{tpu_custom_call.1} parent=5 // pred_region
        %s159 = ssub.s32 %s12, 1
        %s160 = sand.u32 %s25, 1
        %s161 = scalar_lea.sflag [#allocation3], %s160
        %s162 = sand.u32 %s25, 1
        %s163 = smul.addr %s162, 64
        %s164 = scalar_lea.vmem [#allocation2], %s163
        // Predicated region
        $region33: #{tpu_custom_call.1} parent=31 // pred_check
          %p165 = pneg %p38
        $region34: #{tpu_custom_call.1} parent=31 // pred_check_branch
          %167 = sbr.rel (%p165) target = $region36
        $region35: #{tpu_custom_call.1} parent=31 // pred_region
          %168 = dma.done %s161, 1024
        $region36: #{tpu_custom_call.1} parent=31 // pred_fallthru
          _
        %s169 = sand.u32 %s25, 1
        %s170 = scalar_lea.sflag [#allocation3], %s169
        %s171 = sand.u32 %s25, 1
        %s172 = smul.addr %s171, 64
        %s173 = scalar_lea.vmem [#allocation2], %s172
        %p174 = pneg %p38
        %p175 = pneg %p35
        %p176 = pneg %p59
        %p177 = pneg %p56
        %p178 = pneg %p80
        %p179 = pneg %p77
        %p180 = pneg %p106
        %p181 = pneg %p103
        %s182 = smul.u32 4, %s17
        %p183 = scmp.lt.s32.totalorder %s182, 15
        %s184 = scalar_select %p183, %s182, 15
        %s185 = smul.addr %s184, 8
        %s186 = scalar_lea.vmem %s3, %s185
        %s187 = smul.u32 4, %s17
        %s188 = smul.u32 4, %s17
        %p189 = scmp.lt.s32.totalorder %s188, 15
        %s190 = scalar_select %p189, %s188, 15
        %s191 = smul.addr %s190, 8
        %s192 = scalar_lea.vmem %s3, %s191
        %s193 = smul.u32 4, %s17
        %v194 = vld [vmem:[%s164] sm:$0xff]
        %v195 = vld [vmem:[%s164 + $0x10] sm:$0xff]
        %v196 = vld [vmem:[%s164 + $0x20] sm:$0xff]
        %v197 = vld [vmem:[%s164 + $0x30] sm:$0xff]
        %s198 = scalar_lea.vmem %s164, 8 [#allocation2]
        %v199 = vld [vmem:[%s198] sm:$0xff]
        %v200 = vld [vmem:[%s198 + $0x10] sm:$0xff]
        %v201 = vld [vmem:[%s198 + $0x20] sm:$0xff]
        %v202 = vld [vmem:[%s198 + $0x30] sm:$0xff]
        %207 = vrot.lane.b32.xlu0 %v199, 64
        %v208 = vpop.permute.xlu0 %207
        %209 = vrot.lane.b32.xlu0 %v200, 64
        %v210 = vpop.permute.xlu0 %209
        %211 = vrot.lane.b32.xlu0 %v201, 64
        %v212 = vpop.permute.xlu0 %211
        %213 = vrot.lane.b32.xlu0 %v202, 64
        %v214 = vpop.permute.xlu0 %213
        %vm219 = vcmask 523264
        %v220 = vsel %vm219, %v194, %v208
        %v221 = vsel %vm219, %v195, %v210
        %v222 = vsel %vm219, %v196, %v212
        %v223 = vsel %vm219, %v197, %v214
        %224 = vadd.xlane.f32.xlu0 %v220
        %v225 = vpop.xlane.xlu0 %224
        %226 = vadd.xlane.f32.xlu0 %v221
        %v227 = vpop.xlane.xlu0 %226
        %228 = vadd.xlane.f32.xlu0 %v222
        %v229 = vpop.xlane.xlu0 %228
        %230 = vadd.xlane.f32.xlu0 %v223
        %v231 = vpop.xlane.xlu0 %230
        %v232 = vmul.f32 %v225, 0.0078125
        %v233 = vmul.f32 %v227, 0.0078125
        %v234 = vmul.f32 %v229, 0.0078125
        %v235 = vmul.f32 %v231, 0.0078125
        %v236 = vsub.f32 %v220, %v232
        %v237 = vsub.f32 %v221, %v233
        %v238 = vsub.f32 %v222, %v234
        %v239 = vsub.f32 %v223, %v235
        %v240 = vmul.f32 %v236, %v236
        %v241 = vmul.f32 %v237, %v237
        %v242 = vmul.f32 %v238, %v238
        %v243 = vmul.f32 %v239, %v239
        %244 = vadd.xlane.f32.xlu0 %v240
        %v245 = vpop.xlane.xlu0 %244
        %246 = vadd.xlane.f32.xlu0 %v241
        %v247 = vpop.xlane.xlu0 %246
        %248 = vadd.xlane.f32.xlu0 %v242
        %v249 = vpop.xlane.xlu0 %248
        %250 = vadd.xlane.f32.xlu0 %v243
        %v251 = vpop.xlane.xlu0 %250
        %v252 = vmul.f32 %v245, 0.0078125
        %v253 = vmul.f32 %v247, 0.0078125
        %v254 = vmul.f32 %v249, 0.0078125
        %v255 = vmul.f32 %v251, 0.0078125
        %v256 = vadd.f32 %v252, 1e-05
        %v257 = vadd.f32 %v253, 1e-05
        %v258 = vadd.f32 %v254, 1e-05
        %v259 = vadd.f32 %v255, 1e-05
        %v260 = vrsqrt.pop %v256
        %v261 = vrsqrt.pop %v257
        %v262 = vrsqrt.pop %v258
        %v263 = vrsqrt.pop %v259
        %v264 = vld [vmem:[%s1] sm:$0x3]
        %v265 = vld [vmem:[%s2] sm:$0xff]
        %v266 = vld [vmem:[%s2 + $0x8] sm:$0xff]
        %v267 = vld [vmem:[%s2 + $0x10] sm:$0xff]
        %v268 = vld [vmem:[%s2 + $0x18] sm:$0xff]
        %v269 = vld [vmem:[%s2 + $0x20] sm:$0xff]
        %v270 = vld [vmem:[%s2 + $0x28] sm:$0xff]
        %v271 = vld [vmem:[%s2 + $0x30] sm:$0xff]
        %v272 = vld [vmem:[%s2 + $0x38] sm:$0xff]
        %v273 = vld [vmem:[%s2 + $0x40] sm:$0xff]
        %v274 = vld [vmem:[%s2 + $0x48] sm:$0xff]
        %v275 = vld [vmem:[%s2 + $0x50] sm:$0xff]
        %v276 = vld [vmem:[%s2 + $0x58] sm:$0xff]
        %v277 = vld [vmem:[%s2 + $0x60] sm:$0xff]
        %v278 = vld [vmem:[%s2 + $0x68] sm:$0xff]
        %v279 = vld [vmem:[%s2 + $0x70] sm:$0xff]
        %v280 = vld [vmem:[%s2 + $0x78] sm:$0xff]
        %v281 = vmul.f32 %v236, %v260
        %v282 = vmul.f32 %v237, %v261
        %v283 = vmul.f32 %v238, %v262
        %v284 = vmul.f32 %v239, %v263
        %v285 = vlaneseq
        %v286 = vshrl.u32 %v285, 7
        %v287 = vsub.s32 0, %v286
        %v288 = vrot.slane %v264, %v287
        %v289 = vmul.f32 %v281, %v288
        %v290 = vmul.f32 %v282, %v288
        %v291 = vmul.f32 %v283, %v288
        %v292 = vmul.f32 %v284, %v288
        %v293 = vlaneseq
        %v294 = vshrl.u32 %v293, 7
        %v295 = vsub.s32 1, %v294
        %v296 = vrot.slane %v264, %v295
        %v297 = vadd.f32 %v289, %v296
        %v298 = vadd.f32 %v290, %v296
        %v299 = vadd.f32 %v291, %v296
        %v300 = vadd.f32 %v292, %v296
        %301 = vmatprep.subr.mxu0 0.0
        %302 = vmatpush1.msra.mxu0 %v265
        %303 = vmatprep.subr.mxu0 0.0
        %304 = vmatpush1.msra.mxu0 %v266
        %305 = vmatprep.subr.mxu0 0.0
        %306 = vmatpush1.msra.mxu0 %v267
        %307 = vmatprep.subr.mxu0 0.0
        %308 = vmatpush1.msra.mxu0 %v268
        %309 = vmatprep.subr.mxu0 0.0
        %310 = vmatpush1.msra.mxu0 %v269
        %311 = vmatprep.subr.mxu0 0.0
        %312 = vmatpush1.msra.mxu0 %v270
        %313 = vmatprep.subr.mxu0 0.0
        %314 = vmatpush1.msra.mxu0 %v271
        %315 = vmatprep.subr.mxu0 0.0
        %316 = vmatpush1.msra.mxu0 %v272
        %317 = vmatprep.subr.mxu0 0.0
        %318 = vmatpush1.msra.mxu0 %v273
        %319 = vmatprep.subr.mxu0 0.0
        %320 = vmatpush1.msra.mxu0 %v274
        %321 = vmatprep.subr.mxu0 0.0
        %322 = vmatpush1.msra.mxu0 %v275
        %323 = vmatprep.subr.mxu0 0.0
        %324 = vmatpush1.msra.mxu0 %v276
        %325 = vmatprep.subr.mxu0 0.0
        %326 = vmatpush1.msra.mxu0 %v277
        %327 = vmatprep.subr.mxu0 0.0
        %328 = vmatpush1.msra.mxu0 %v278
        %329 = vmatprep.subr.mxu0 0.0
        %330 = vmatpush1.msra.mxu0 %v279
        %331 = vmatprep.subr.mxu0 0.0
        %332 = vmatpush1.msra.mxu0 %v280
        %333 = vmatprep.subr.mxu0 0.0
        %334 = vmatpush1.msra.mxu0 0.0
        %335 = vmatprep.subr.mxu0 0.0
        %336 = vmatpush1.msra.mxu0 0.0
        %337 = vmatprep.subr.mxu0 0.0
        %338 = vmatpush1.msra.mxu0 0.0
        %339 = vmatprep.subr.mxu0 0.0
        %340 = vmatpush1.msra.mxu0 0.0
        %341 = vmatprep.subr.mxu0 0.0
        %342 = vmatpush1.msra.mxu0 0.0
        %343 = vmatprep.subr.mxu0 0.0
        %344 = vmatpush1.msra.mxu0 0.0
        %345 = vmatprep.subr.mxu0 0.0
        %346 = vmatpush1.msra.mxu0 0.0
        %347 = vmatprep.subr.mxu0 0.0
        %348 = vmatpush1.msra.mxu0 0.0
        %349 = vmatprep.subr.mxu0 0.0
        %350 = vmatpush1.msra.mxu0 0.0
        %351 = vmatprep.subr.mxu0 0.0
        %352 = vmatpush1.msra.mxu0 0.0
        %353 = vmatprep.subr.mxu0 0.0
        %354 = vmatpush1.msra.mxu0 0.0
        %355 = vmatprep.subr.mxu0 0.0
        %356 = vmatpush1.msra.mxu0 0.0
        %357 = vmatprep.subr.mxu0 0.0
        %358 = vmatpush1.msra.mxu0 0.0
        %359 = vmatprep.subr.mxu0 0.0
        %360 = vmatpush1.msra.mxu0 0.0
        %361 = vmatprep.subr.mxu0 0.0
        %362 = vmatpush1.msra.mxu0 0.0
        %363 = vmatprep.subr.mxu0 0.0
        %364 = vmatpush1.msra.mxu0 0.0
        %365 = vmatprep.mubr.f32.mxu0 0.0
        %366 = vmatmul.mubr.f32.gmra.mrb[0].mxu0 %v297
        %v367 = vpop.f32.mrb[0].mxu0
        %v368 = vadd.f32 0.0, %v367
        %v369 = vpop.f32.mrb[0].mxu0
        %370 = vmatprep.mubr.f32.mxu0 0.0
        %371 = vmatmul.mubr.f32.gmra.mrb[0].mxu0 %v298
        %v372 = vpop.f32.mrb[0].mxu0
        %v373 = vadd.f32 0.0, %v372
        %v374 = vpop.f32.mrb[0].mxu0
        %375 = vmatprep.mubr.f32.mxu0 0.0
        %376 = vmatmul.mubr.f32.gmra.mrb[0].mxu0 %v299
        %v377 = vpop.f32.mrb[0].mxu0
        %v378 = vadd.f32 0.0, %v377
        %v379 = vpop.f32.mrb[0].mxu0
        %380 = vmatprep.mubr.f32.mxu0 0.0
        %381 = vmatmul.mubr.f32.gmra.mrb[0].mxu0 %v300
        %v382 = vpop.f32.mrb[0].mxu0
        %v383 = vadd.f32 0.0, %v382
        %v384 = vpop.f32.mrb[0].mxu0
        %385 = vdwg.mxu0
        %386 = vst.msk [vmem:[%s192] sm:$0xff] %vm219, %v368
        %387 = vst.msk [vmem:[%s192 + $0x8] sm:$0xff] %vm219, %v373
        %388 = vst.msk [vmem:[%s192 + $0x10] sm:$0xff] %vm219, %v378
        %389 = vst.msk [vmem:[%s192 + $0x18] sm:$0xff] %vm219, %v383
        %s390 = smul.u32 4, %s17
        %p391 = scmp.lt.s32.totalorder %s390, 15
        %s392 = scalar_select %p391, %s390, 15
        %s393 = smul.addr %s392, 8
        %s394 = scalar_lea.vmem %s3, %s393
        // Predicated region
        $region37: #{tpu_custom_call.1} parent=31 // pred_check
          %p395 = pneg %p103
        $region38: #{tpu_custom_call.1} parent=31 // pred_check_branch
          %397 = sbr.rel (%p395) target = $region40
        $region39: #{tpu_custom_call.1} parent=31 // pred_region
          %s398 = smul.u32 4, %s17
        $region40: #{tpu_custom_call.1} parent=31 // pred_fallthru
          _
      $region32: #{tpu_custom_call.1} parent=5 // pred_fallthru
        _
      %p399 = scmp.le.s32.totalorder 2, %s12
      // Predicated region
      $region41: #{tpu_custom_call.1} parent=5 // pred_check
        %p400 = pneg %p399
      $region42: #{tpu_custom_call.1} parent=5 // pred_check_branch
        %402 = sbr.rel (%p400) target = $region44
      $region43: #{tpu_custom_call.1} parent=5 // pred_region
        %s403 = ssub.s32 %s12, 2
        // Predicated region
        $region45: #{tpu_custom_call.1} parent=43 // pred_check
          %p404 = pneg %p109
        $region46: #{tpu_custom_call.1} parent=43 // pred_check_branch
          %406 = sbr.rel (%p404) target = $region48
        $region47: #{tpu_custom_call.1} parent=43 // pred_region
          %s407 = smul.u32 4, %s18
          %p408 = scmp.lt.s32.totalorder %s407, 15
          %s409 = scalar_select %p408, %s407, 15
          %s410 = smul.addr %s409, 8
          %s411 = scalar_lea.vmem %s3, %s410
        $region48: #{tpu_custom_call.1} parent=43 // pred_fallthru
          _
      $region44: #{tpu_custom_call.1} parent=5 // pred_fallthru
        _
    $region6: #{tpu_custom_call.1} parent=1 // loop_footer
      %s16 = sadd.s32 1, %s12
    $region7: #{tpu_custom_call.1} parent=1 // loop_footer_branch
      %11 = sbr.rel target = $region3
    $region8: #{tpu_custom_call.1} parent=1 // loop_exit
      _
    %412 = vsyncpa [#allocation3], 1
    %s413 = scalar_lea.sflag [#allocation3], 1
    %414 = vsyncpa %s413, 1

</llo_original>
